<compile_context>
chip_gen: v7x
topology: tpu7x:2x2x1
jax: 0.10.0
libtpu: 0.0.40
codegen_flags: <defaults>
</compile_context>

<pallas_src>
import numpy as np

import jax
import jax.numpy as jnp
from jax import lax
from jax.experimental import pallas as pl
from jax.experimental.pallas import tpu as pltpu


# ---------------------------------------------------------------------------
# Wrapper-side weight preparation (done once, outside the kernel).
# ---------------------------------------------------------------------------

def _conv_toeplitz(w_hwio, W):
    """(3,3,Ci,Co) HWIO conv weight -> (3, W*Ci, W*Co) banded block-Toeplitz.

    t[ky] realizes the kx taps of a 3x3 'SAME' conv along the fused W*C lane
    axis:  out[:, wo*Co+o] = sum_{wi,i} in[:, wi*Ci+i] * t[ky, wi*Ci+i, wo*Co+o],
    with the W-boundary zero padding implicit in the band structure.
    """
    w = np.asarray(w_hwio, np.float32)
    _, _, Ci, Co = w.shape
    t = np.zeros((3, W * Ci, W * Co), np.float32)
    for ky in range(3):
        for kx in range(3):
            for wo in range(W):
                wi = wo + kx - 1
                if 0 <= wi < W:
                    t[ky, wi * Ci:(wi + 1) * Ci, wo * Co:(wo + 1) * Co] = w[ky, kx]
    return t


def _block_diag(w_io, W):
    """(Ci,Co) 1x1 conv weight -> (W*Ci, W*Co) block-diagonal matrix."""
    w = np.asarray(w_io, np.float32)
    Ci, Co = w.shape
    d = np.zeros((W * Ci, W * Co), np.float32)
    for wo in range(W):
        d[wo * Ci:(wo + 1) * Ci, wo * Co:(wo + 1) * Co] = w
    return d


def prepare_kernel_params(p, W):
    """Fold BN to per-channel affine and build K-stacked bf16 conv weights.

    Prepared weights depend only on W (not N or H) — the row-shift handling
    moved into the kernel (roll + boundary mask).
    """
    Cin, Cout = p['wsc'].shape
    WCi, WCo = W * Cin, W * Cout

    t1 = _conv_toeplitz(p['w1_hwio'], W)          # (3, WCi, WCo)
    t2 = _conv_toeplitz(p['w2_hwio'], W)          # (3, WCo, WCo)
    wsc = _block_diag(p['wsc'], W)                # (WCi, WCo)

    # conv1: ky taps stacked along K (weight rows); the 1x1 shortcut is a second
    # output block fed only by the middle (unshifted) K block.
    w1cat = np.zeros((3 * WCi, 2 * WCo), np.float32)
    for ky in range(3):
        w1cat[ky * WCi:(ky + 1) * WCi, :WCo] = t1[ky]
    w1cat[WCi:2 * WCi, WCo:] = wsc                # (3*WCi, 2*WCo)

    # conv2: ky taps stacked along K only.
    w2cat = np.concatenate([t2[0], t2[1], t2[2]], axis=0)   # (3*WCo, WCo)

    return {
        's1': jnp.tile(p['s1'], W).reshape(1, WCi),
        'b1': jnp.tile(p['b1'], W).reshape(1, WCi),
        's2': jnp.tile(p['s2'], W).reshape(1, WCo),
        'b2': jnp.tile(p['b2'], W).reshape(1, WCo),
        'w1cat': jnp.asarray(w1cat, jnp.bfloat16),   # bf16 MXU operands
        'w2cat': jnp.asarray(w2cat, jnp.bfloat16),
    }


# ---------------------------------------------------------------------------
# Pallas kernel + wrapper.
# ---------------------------------------------------------------------------

def preact_block(x_nhwc, kp, *, row_tile=None):
    N, H, W, Cin = x_nhwc.shape
    WCi = W * Cin
    WCo = kp['w2cat'].shape[1]                    # W * Cout
    Cout = WCo // W
    NH = N * H

    if row_tile is None:
        # Largest multiple of H dividing NH, capped at ~512 rows per tile.
        row_tile = H
        for t in range(H, min(NH, 512) + 1, H):
            if NH % t == 0:
                row_tile = t
    assert NH % row_tile == 0 and row_tile % H == 0 and row_tile % 8 == 0
    T = row_tile
    nt = NH // T

    x2d = x_nhwc.reshape(NH, WCi)                 # lane-fused (rows, W*C) layout

    def kernel(x_ref, s1_ref, b1_ref, w1_ref, s2_ref, b2_ref, w2_ref, o_ref):
        f32 = jnp.float32
        bf16 = jnp.bfloat16

        # Image-boundary masks over the fused row axis.  T % H == 0, so the
        # local row index suffices and tile edges coincide with image edges
        # (no halo DMA needed: edge rows are masked to zero anyway).
        row = lax.broadcasted_iota(jnp.int32, (T, 1), 0) % H
        keep_up = row != 0                        # row r-1 exists in-image
        keep_dn = row != (H - 1)                  # row r+1 exists in-image

        def shifted(h):
            # h_m1[r] = h[r-1], h_p1[r] = h[r+1]; zero at image boundaries.
            # XLU sublane rotations; wrapped rows land on masked positions.
            h_m1 = jnp.where(keep_up, pltpu.roll(h, 1, axis=0), 0.0)
            h_p1 = jnp.where(keep_dn, pltpu.roll(h, T - 1, axis=0), 0.0)
            return h_m1, h_p1

        # out = relu(bn1(x))  — f32 elementwise (no bf16 VPU on v5e).
        h = jnp.maximum(x_ref[...] * s1_ref[...] + b1_ref[...], 0.0)   # (T, WCi)
        h_m1, h_p1 = shifted(h)

        # conv1 + fused 1x1 shortcut: one MXU matmul, K = 3*WCi, bf16 operands,
        # f32 accumulation.
        lhs1 = jnp.concatenate([h_m1, h, h_p1], axis=1).astype(bf16)   # (T, 3*WCi)
        y1 = jnp.dot(lhs1, w1_ref[...], preferred_element_type=f32)    # (T, 2*WCo)
        c1 = y1[:, :WCo]                                               # conv1(out)
        sc = y1[:, WCo:]                                               # shortcut

        # relu(bn2(conv1(out)))  — f32 elementwise.
        h2 = jnp.maximum(c1 * s2_ref[...] + b2_ref[...], 0.0)          # (T, WCo)
        h2_m1, h2_p1 = shifted(h2)

        # conv2: one MXU matmul, K = 3*WCo.
        lhs2 = jnp.concatenate([h2_m1, h2, h2_p1], axis=1).astype(bf16)  # (T, 3*WCo)
        c2 = jnp.dot(lhs2, w2_ref[...], preferred_element_type=f32)      # (T, WCo)

        o_ref[...] = (c2 + sc).astype(o_ref.dtype)    # lane-dense 128-wide store

    # Rough per-step VMEM estimate (double-buffered I/O tiles + weights +
    # intermediates), with headroom; stays well under v7x's 64 MiB.
    def _nbytes(a):
        return int(a.size) * a.dtype.itemsize

    tile_io = T * (WCi + WCo) * 4
    weights = _nbytes(kp['w1cat']) + _nbytes(kp['w2cat'])
    interm = T * (3 * WCi + 3 * WCo) * 2 + T * (3 * WCo) * 4
    est = 2 * tile_io + 2 * weights + interm + 2 * (_nbytes(kp['s1']) + _nbytes(kp['s2']))
    vmem_limit = int(min(48 * 2**20, max(32 * 2**20, 4 * est)))

    const = lambda i: (0, 0)
    out2d = pl.pallas_call(
        kernel,
        out_shape=jax.ShapeDtypeStruct((NH, WCo), x_nhwc.dtype),
        grid=(nt,),                                   # independent row tiles
        in_specs=[
            pl.BlockSpec((T, WCi), lambda i: (i, 0)),       # x row tile
            pl.BlockSpec((1, WCi), const),                  # bn1 scale
            pl.BlockSpec((1, WCi), const),                  # bn1 bias
            pl.BlockSpec((3 * WCi, 2 * WCo), const),        # conv1 + shortcut weight
            pl.BlockSpec((1, WCo), const),                  # bn2 scale
            pl.BlockSpec((1, WCo), const),                  # bn2 bias
            pl.BlockSpec((3 * WCo, WCo), const),            # conv2 weight
        ],
        out_specs=pl.BlockSpec((T, WCo), lambda i: (i, 0)),
        compiler_params=pltpu.CompilerParams(
            dimension_semantics=("parallel",),              # megacore-shardable
            vmem_limit_bytes=vmem_limit),
    )(x2d, kp['s1'], kp['b1'], kp['w1cat'], kp['s2'], kp['b2'], kp['w2cat'])

    return out2d.reshape(N, H, W, Cout)


# ---------------------------------------------------------------------------
# Deterministic parameters + pure-JAX reference.
# ---------------------------------------------------------------------------

def make_params(key, cin, cout, eps=1e-5):
    ks = jax.random.split(key, 10)
    # BN1 params + running stats (inference mode)
    g1 = 1.0 + 0.1 * jax.random.normal(ks[0], (cin,), jnp.float32)
    be1 = 0.1 * jax.random.normal(ks[1], (cin,), jnp.float32)
    m1 = 0.05 * jax.random.normal(ks[2], (cin,), jnp.float32)
    v1 = 1.0 + 0.1 * jnp.abs(jax.random.normal(ks[3], (cin,), jnp.float32))
    # BN2 params + running stats
    g2 = 1.0 + 0.1 * jax.random.normal(ks[4], (cout,), jnp.float32)
    be2 = 0.1 * jax.random.normal(ks[5], (cout,), jnp.float32)
    m2 = 0.05 * jax.random.normal(ks[6], (cout,), jnp.float32)
    v2 = 1.0 + 0.1 * jnp.abs(jax.random.normal(ks[7], (cout,), jnp.float32))

    s1 = g1 / jnp.sqrt(v1 + eps)
    b1 = be1 - m1 * s1
    s2 = g2 / jnp.sqrt(v2 + eps)
    b2 = be2 - m2 * s2

    w1_hwio = 0.1 * jax.random.normal(ks[8], (3, 3, cin, cout), jnp.float32)
    w2_hwio = 0.1 * jax.random.normal(ks[9], (3, 3, cout, cout), jnp.float32)
    wsc = 0.1 * jax.random.normal(jax.random.fold_in(key, 99),
                                  (cin, cout), jnp.float32)

    return {'s1': s1, 'b1': b1, 's2': s2, 'b2': b2,
            'w1_hwio': w1_hwio, 'w2_hwio': w2_hwio, 'wsc': wsc}


def reference_nhwc(x, p):
    """Pure-JAX reference of the PreActBlock forward (NHWC, inference BN)."""
    h = jax.nn.relu(x * p['s1'] + p['b1'])
    sc = jnp.einsum('nhwi,io->nhwo', h, p['wsc'])
    dn = ('NHWC', 'HWIO', 'NHWC')
    c1 = lax.conv_general_dilated(h, p['w1_hwio'], (1, 1), 'SAME',
                                  dimension_numbers=dn)
    h2 = jax.nn.relu(c1 * p['s2'] + p['b2'])
    c2 = lax.conv_general_dilated(h2, p['w2_hwio'], (1, 1), 'SAME',
                                  dimension_numbers=dn)
    return c2 + sc


if __name__ == "__main__":
    key = jax.random.PRNGKey(0)
    N, Cin, Cout, H, W = 2, 4, 8, 16, 16   # stride=1, Cin != Cout -> shortcut conv

    k_x, k_p = jax.random.split(key)
    x_nchw = jax.random.normal(k_x, (N, Cin, H, W), jnp.float32)  # PyTorch layout
    x_nhwc = jnp.transpose(x_nchw, (0, 2, 3, 1))                  # kernel layout

    params = make_params(k_p, Cin, Cout)
    kparams = prepare_kernel_params(params, W)

    # row_tile=H -> 2 grid steps: exercises the parallel row axis, the
    # pipelined tiling path and the image-boundary masks across tile edges.
    out = preact_block(x_nhwc, kparams, row_tile=H)
    out = jax.block_until_ready(out)

    ref = reference_nhwc(x_nhwc, params)
    assert out.shape == (N, H, W, Cout)
    max_err = float(jnp.max(jnp.abs(out - ref)))
    # bf16 MXU operands (f32 accumulation) -> loosened tolerance per review.
    assert jnp.allclose(out, ref, atol=3e-2, rtol=3e-2), max_err

    print("KERNEL_OK")
</pallas_src>

<mosaic_0001>
module attributes {stable_mosaic.version = 11 : i64} {
  func.func @kernel(%arg0: i32, %arg1: memref<16x64xf32, #tpu.memory_space<vmem>>, %arg2: memref<1x64xf32, #tpu.memory_space<vmem>>, %arg3: memref<1x64xf32, #tpu.memory_space<vmem>>, %arg4: memref<192x256xbf16, #tpu.memory_space<vmem>>, %arg5: memref<1x128xf32, #tpu.memory_space<vmem>>, %arg6: memref<1x128xf32, #tpu.memory_space<vmem>>, %arg7: memref<384x128xbf16, #tpu.memory_space<vmem>>, %arg8: memref<16x128xf32, #tpu.memory_space<vmem>>) attributes {dimension_semantics = [#tpu.dimension_semantics<parallel>], iteration_bounds = array<i64: 2>, scalar_prefetch = 0 : i64, scratch_operands = 0 : i64, tpu.core_type = #tpu.core_type<tc>, window_params = [{transform_indices = @transform_0, window_bounds = array<i64: 16, 64>}, {pipeline_mode = #tpu.pipeline_mode<synchronous>, transform_indices = @transform_1, window_bounds = array<i64: 1, 64>}, {pipeline_mode = #tpu.pipeline_mode<synchronous>, transform_indices = @transform_2, window_bounds = array<i64: 1, 64>}, {pipeline_mode = #tpu.pipeline_mode<synchronous>, transform_indices = @transform_3, window_bounds = array<i64: 192, 256>}, {pipeline_mode = #tpu.pipeline_mode<synchronous>, transform_indices = @transform_4, window_bounds = array<i64: 1, 128>}, {pipeline_mode = #tpu.pipeline_mode<synchronous>, transform_indices = @transform_5, window_bounds = array<i64: 1, 128>}, {pipeline_mode = #tpu.pipeline_mode<synchronous>, transform_indices = @transform_6, window_bounds = array<i64: 384, 128>}, {transform_indices = @transform_7, window_bounds = array<i64: 16, 128>}]} {
    %0 = tpu.iota {dimensions = array<i32: 0>} : vector<16x1xi32>
    %c16_i32 = arith.constant 16 : i32
    %c0_i32 = arith.constant 0 : i32
    %1 = arith.cmpi eq, %c16_i32, %c0_i32 : i32
    %c1_i32 = arith.constant 1 : i32
    %2 = arith.select %1, %c1_i32, %c16_i32 : i32
    %3 = vector.broadcast %2 : i32 to vector<16x1xi32>
    %4 = arith.remsi %0, %3 : vector<16x1xi32>
    %c0_i32_0 = arith.constant 0 : i32
    %5 = vector.broadcast %c0_i32_0 : i32 to vector<16x1xi32>
    %6 = arith.cmpi ne, %4, %5 : vector<16x1xi32>
    %c0_i32_1 = arith.constant 0 : i32
    %7 = vector.broadcast %c0_i32_1 : i32 to vector<16x1xi32>
    %8 = arith.cmpi slt, %4, %7 : vector<16x1xi32>
    %c0_i32_2 = arith.constant 0 : i32
    %9 = arith.cmpi slt, %2, %c0_i32_2 : i32
    %10 = vector.broadcast %9 : i1 to vector<16x1xi1>
    %11 = vector.broadcast %10 : vector<16x1xi1> to vector<16x1xi1>
    %12 = arith.xori %8, %11 : vector<16x1xi1>
    %13 = arith.andi %12, %6 : vector<16x1xi1>
    %14 = vector.broadcast %2 : i32 to vector<16x1xi32>
    %15 = arith.addi %4, %14 : vector<16x1xi32>
    %16 = arith.select %13, %15, %4 : vector<16x1xi1>, vector<16x1xi32>
    %c0_i32_3 = arith.constant 0 : i32
    %17 = vector.broadcast %c0_i32_3 : i32 to vector<16x1xi32>
    %18 = arith.cmpi ne, %16, %17 : vector<16x1xi32>
    %c15_i32 = arith.constant 15 : i32
    %19 = vector.broadcast %c15_i32 : i32 to vector<16x1xi32>
    %20 = arith.cmpi ne, %16, %19 : vector<16x1xi32>
    %c0 = arith.constant 0 : index
    %c0_4 = arith.constant 0 : index
    %21 = vector.load %arg1[%c0, %c0_4] : memref<16x64xf32, #tpu.memory_space<vmem>>, vector<16x64xf32>
    %c0_5 = arith.constant 0 : index
    %c0_6 = arith.constant 0 : index
    %22 = vector.load %arg2[%c0_5, %c0_6] : memref<1x64xf32, #tpu.memory_space<vmem>>, vector<1x64xf32>
    %23 = vector.broadcast %22 : vector<1x64xf32> to vector<16x64xf32>
    %24 = arith.mulf %21, %23 : vector<16x64xf32>
    %c0_7 = arith.constant 0 : index
    %c0_8 = arith.constant 0 : index
    %25 = vector.load %arg3[%c0_7, %c0_8] : memref<1x64xf32, #tpu.memory_space<vmem>>, vector<1x64xf32>
    %26 = vector.broadcast %25 : vector<1x64xf32> to vector<16x64xf32>
    %27 = arith.addf %24, %26 : vector<16x64xf32>
    %cst = arith.constant 0.000000e+00 : f32
    %28 = vector.broadcast %cst : f32 to vector<16x64xf32>
    %29 = arith.maximumf %27, %28 : vector<16x64xf32>
    %c1_i32_9 = arith.constant 1 : i32
    %30 = tpu.dynamic_rotate %29 by %c1_i32_9 dim 0 : vector<16x64xf32>, i32 -> vector<16x64xf32>
    %cst_10 = arith.constant 0.000000e+00 : f32
    %31 = vector.shape_cast %18 : vector<16x1xi1> to vector<16x1xi1>
    %32 = vector.broadcast %31 : vector<16x1xi1> to vector<16x64xi1>
    %33 = vector.broadcast %cst_10 : f32 to vector<16x64xf32>
    %34 = arith.select %32, %30, %33 : vector<16x64xi1>, vector<16x64xf32>
    %c15_i32_11 = arith.constant 15 : i32
    %35 = tpu.dynamic_rotate %29 by %c15_i32_11 dim 0 : vector<16x64xf32>, i32 -> vector<16x64xf32>
    %cst_12 = arith.constant 0.000000e+00 : f32
    %36 = vector.shape_cast %20 : vector<16x1xi1> to vector<16x1xi1>
    %37 = vector.broadcast %36 : vector<16x1xi1> to vector<16x64xi1>
    %38 = vector.broadcast %cst_12 : f32 to vector<16x64xf32>
    %39 = arith.select %37, %35, %38 : vector<16x64xi1>, vector<16x64xf32>
    %40 = tpu.concatenate %34, %29, %39 in 1 : vector<16x64xf32>, vector<16x64xf32>, vector<16x64xf32> -> vector<16x192xf32>
    %41 = arith.truncf %40 : vector<16x192xf32> to vector<16x192xbf16>
    %c0_13 = arith.constant 0 : index
    %c0_14 = arith.constant 0 : index
    %42 = vector.load %arg4[%c0_13, %c0_14] : memref<192x256xbf16, #tpu.memory_space<vmem>>, vector<192x256xbf16>
    %cst_15 = arith.constant dense<0.000000e+00> : vector<16x256xf32>
    %43 = tpu.matmul %41, %42, %cst_15 {dimension_numbers = #tpu.dot_dimension_numbers<[1], [0], [0], [1], [0, 0, 1, 1], [], []>} : vector<16x192xbf16>, vector<192x256xbf16>, vector<16x256xf32> -> vector<16x256xf32>
    %44 = vector.extract_strided_slice %43 {offsets = [0, 0], sizes = [16, 128], strides = [1, 1]} : vector<16x256xf32> to vector<16x128xf32>
    %45 = vector.extract_strided_slice %43 {offsets = [0, 128], sizes = [16, 128], strides = [1, 1]} : vector<16x256xf32> to vector<16x128xf32>
    %c0_16 = arith.constant 0 : index
    %c0_17 = arith.constant 0 : index
    %46 = vector.load %arg5[%c0_16, %c0_17] : memref<1x128xf32, #tpu.memory_space<vmem>>, vector<1x128xf32>
    %47 = vector.broadcast %46 : vector<1x128xf32> to vector<16x128xf32>
    %48 = arith.mulf %44, %47 : vector<16x128xf32>
    %c0_18 = arith.constant 0 : index
    %c0_19 = arith.constant 0 : index
    %49 = vector.load %arg6[%c0_18, %c0_19] : memref<1x128xf32, #tpu.memory_space<vmem>>, vector<1x128xf32>
    %50 = vector.broadcast %49 : vector<1x128xf32> to vector<16x128xf32>
    %51 = arith.addf %48, %50 : vector<16x128xf32>
    %cst_20 = arith.constant 0.000000e+00 : f32
    %52 = vector.broadcast %cst_20 : f32 to vector<16x128xf32>
    %53 = arith.maximumf %51, %52 : vector<16x128xf32>
    %c1_i32_21 = arith.constant 1 : i32
    %54 = tpu.dynamic_rotate %53 by %c1_i32_21 dim 0 : vector<16x128xf32>, i32 -> vector<16x128xf32>
    %cst_22 = arith.constant 0.000000e+00 : f32
    %55 = vector.shape_cast %18 : vector<16x1xi1> to vector<16x1xi1>
    %56 = vector.broadcast %55 : vector<16x1xi1> to vector<16x128xi1>
    %57 = vector.broadcast %cst_22 : f32 to vector<16x128xf32>
    %58 = arith.select %56, %54, %57 : vector<16x128xi1>, vector<16x128xf32>
    %c15_i32_23 = arith.constant 15 : i32
    %59 = tpu.dynamic_rotate %53 by %c15_i32_23 dim 0 : vector<16x128xf32>, i32 -> vector<16x128xf32>
    %cst_24 = arith.constant 0.000000e+00 : f32
    %60 = vector.shape_cast %20 : vector<16x1xi1> to vector<16x1xi1>
    %61 = vector.broadcast %60 : vector<16x1xi1> to vector<16x128xi1>
    %62 = vector.broadcast %cst_24 : f32 to vector<16x128xf32>
    %63 = arith.select %61, %59, %62 : vector<16x128xi1>, vector<16x128xf32>
    %64 = tpu.concatenate %58, %53, %63 in 1 : vector<16x128xf32>, vector<16x128xf32>, vector<16x128xf32> -> vector<16x384xf32>
    %65 = arith.truncf %64 : vector<16x384xf32> to vector<16x384xbf16>
    %c0_25 = arith.constant 0 : index
    %c0_26 = arith.constant 0 : index
    %66 = vector.load %arg7[%c0_25, %c0_26] : memref<384x128xbf16, #tpu.memory_space<vmem>>, vector<384x128xbf16>
    %cst_27 = arith.constant dense<0.000000e+00> : vector<16x128xf32>
    %67 = tpu.matmul %65, %66, %cst_27 {dimension_numbers = #tpu.dot_dimension_numbers<[1], [0], [0], [1], [0, 0, 1, 1], [], []>} : vector<16x384xbf16>, vector<384x128xbf16>, vector<16x128xf32> -> vector<16x128xf32>
    %68 = arith.addf %67, %45 : vector<16x128xf32>
    %c0_28 = arith.constant 0 : index
    %c0_29 = arith.constant 0 : index
    %69 = vector.load %arg8[%c0_28, %c0_29] : memref<16x128xf32, #tpu.memory_space<vmem>>, vector<16x128xf32>
    tpu.vector_store %arg8[%c0_28, %c0_29], %68 {strides = array<i32>} : memref<16x128xf32, #tpu.memory_space<vmem>>, vector<16x128xf32>,
    return
  }
  func.func @transform_0(%arg0: i32) -> (i32, i32) {
    %c0_i32 = arith.constant 0 : i32
    %c0_i32_0 = arith.constant 0 : i32
    return %arg0, %c0_i32 : i32, i32
  }
  func.func @transform_1(%arg0: i32) -> (i32, i32) {
    %c0_i32 = arith.constant 0 : i32
    %c0_i32_0 = arith.constant 0 : i32
    %c0_i32_1 = arith.constant 0 : i32
    return %c0_i32, %c0_i32_0 : i32, i32
  }
  func.func @transform_2(%arg0: i32) -> (i32, i32) {
    %c0_i32 = arith.constant 0 : i32
    %c0_i32_0 = arith.constant 0 : i32
    %c0_i32_1 = arith.constant 0 : i32
    return %c0_i32, %c0_i32_0 : i32, i32
  }
  func.func @transform_3(%arg0: i32) -> (i32, i32) {
    %c0_i32 = arith.constant 0 : i32
    %c0_i32_0 = arith.constant 0 : i32
    %c0_i32_1 = arith.constant 0 : i32
    return %c0_i32, %c0_i32_0 : i32, i32
  }
  func.func @transform_4(%arg0: i32) -> (i32, i32) {
    %c0_i32 = arith.constant 0 : i32
    %c0_i32_0 = arith.constant 0 : i32
    %c0_i32_1 = arith.constant 0 : i32
    return %c0_i32, %c0_i32_0 : i32, i32
  }
  func.func @transform_5(%arg0: i32) -> (i32, i32) {
    %c0_i32 = arith.constant 0 : i32
    %c0_i32_0 = arith.constant 0 : i32
    %c0_i32_1 = arith.constant 0 : i32
    return %c0_i32, %c0_i32_0 : i32, i32
  }
  func.func @transform_6(%arg0: i32) -> (i32, i32) {
    %c0_i32 = arith.constant 0 : i32
    %c0_i32_0 = arith.constant 0 : i32
    %c0_i32_1 = arith.constant 0 : i32
    return %c0_i32, %c0_i32_0 : i32, i32
  }
  func.func @transform_7(%arg0: i32) -> (i32, i32) {
    %c0_i32 = arith.constant 0 : i32
    %c0_i32_0 = arith.constant 0 : i32
    return %arg0, %c0_i32 : i32, i32
  }
}

</mosaic_0001>

<llo_original>
// kernel: tpu_custom_call.1
$region0: #{tpu_custom_call.1}
  #allocation0 [shape = 'u32[]', space=smem, size = 0x4, offset = 0x4, fixed_abs, tag = 'smem constant byte address 0x4 - core index']
  #allocation1 [shape = 'u32[144,128]{1,0:T(1,128)}', space=vmem, size = 0x12000, scoped, tag = 'internal scratch']
  %s0 = inlined_call_operand.hbm [shape: f32[32,64], index: 0, kind: input, shape index: {}]
  %s1 = inlined_call_operand.vmem [shape: f32[1,64], index: 1, kind: input, shape index: {}]
  %s2 = inlined_call_operand.vmem [shape: f32[1,64], index: 2, kind: input, shape index: {}]
  %s3 = inlined_call_operand.hbm [shape: bf16[192,256], index: 3, kind: input, shape index: {}]
  %s4 = inlined_call_operand.vmem [shape: f32[1,128], index: 4, kind: input, shape index: {}]
  %s5 = inlined_call_operand.vmem [shape: f32[1,128], index: 5, kind: input, shape index: {}]
  %s6 = inlined_call_operand.hbm [shape: bf16[384,128], index: 6, kind: input, shape index: {}]
  %s7 = inlined_call_operand.hbm [shape: f32[32,128], index: 7, kind: output, shape index: {}]
  %s8 = sld [smem:[#allocation0]]
  $region73: #{tpu_custom_call.1} parent=0
    _
  %s10 = ssub.s32 1, %s8
  %s11 = scalar_select 0, %s10, %s8
  $region1: #{tpu_custom_call.1} parent=0
    #allocation2 [shape = 'u8[16384]{0}', space=vmem, size = 0x4000, scoped, tag = 'input window, operand 0']
    #allocation3 [shape = 's32[2]{0}', space=sflag, size = 0x8, scoped, tag = 'scoped memory for tpu_custom_call.1']
    #allocation4 [shape = 's32[2]{0}', space=sflag, size = 0x8, scoped, tag = 'scoped memory for tpu_custom_call.1']
    #allocation5 [shape = 'u8[98304]{0}', space=vmem, size = 0x18000, scoped, tag = 'input window, operand 3, single buffered']
    #allocation6 [shape = 's32[1]{0}', space=sflag, size = 0x4, scoped, tag = 'scoped memory for tpu_custom_call.1']
    #allocation7 [shape = 'u8[98304]{0}', space=vmem, size = 0x18000, scoped, tag = 'input window, operand 6, single buffered']
    #allocation8 [shape = 'u8[16384]{0}', space=vmem, size = 0x4000, scoped, tag = 'output window, operand 0']
    %12 = vsyncpa [#allocation3], 0
    %s13 = scalar_lea.sflag [#allocation3], 1
    %14 = vsyncpa %s13, 0
    %15 = vsyncpa [#allocation6], 0
    %16 = vsyncpa [#allocation4], 0
    %s17 = scalar_lea.sflag [#allocation4], 1
    %18 = vsyncpa %s17, 0
    loop: start=0, step=1, limit=4
    $region2: #{tpu_custom_call.1} parent=1 // loop_pre_header
      _
    $region3: #{tpu_custom_call.1} parent=1 // loop_header
      %s20 = sphi 0, %s24
      %p21 = scmp.ge.s32.totalorder %s20, 4
      %s30 = sphi 0, %s32
      %s33 = sphi 0, %s30
      %s34 = sphi 0, %s33
      %s50 = sphi 0, %s34
      %s54 = sphi 0, %s54
      %s56 = sphi 0, %s54
      %s57 = sphi 0, %s56
      %s71 = sphi 0, %s57
      %s75 = sphi 0, %s75
      %s77 = sphi 0, %s75
      %s78 = sphi 0, %s77
      %s92 = sphi 0, %s78
      %s96 = sphi 0, %s96
      %s98 = sphi 0, %s96
      %s99 = sphi 0, %s98
      %s113 = sphi 0, %s99
      %s117 = sphi 0, %s117
      %s119 = sphi 0, %s117
      %s120 = sphi 0, %s119
      %s134 = sphi 0, %s120
      %s138 = sphi 0, %s138
      %s140 = sphi 0, %s138
      %s141 = sphi 0, %s140
      %s155 = sphi 0, %s141
      %s159 = sphi 0, %s159
      %s161 = sphi 0, %s159
      %s162 = sphi 0, %s161
      %s176 = sphi 0, %s162
      %s182 = sphi 0, %s184
      %s185 = sphi 0, %s182
      %s186 = sphi 0, %s185
      %s202 = sphi 0, %s186
    $region4: #{tpu_custom_call.1} parent=1 // loop_header_branch
      %23 = sbr.rel (%p21) target = $region8
    $region5: #{tpu_custom_call.1} parent=1 // loop_body
      %s25 = ssub.s32 %s20, 1
      %s26 = ssub.s32 %s20, 2
      %s27 = sadd.s32 %s20, 1
      %s28 = ssub.s32 %s20, %s27
      %p29 = scmp.eq.s32.totalorder %s28, 0
      %s31 = sadd.s32 %s30, 1
      %s32 = scalar_select %p29, %s30, %s31
      %p35 = pneg %p29
      %p36 = scmp.eq.s32.totalorder %s20, 1
      %p37 = por %p35, %p36
      %p38 = scmp.ne.s32.totalorder %s30, %s33
      %p39 = scmp.eq.s32.totalorder %s20, 0
      %p40 = por %p38, %p39
      %p41 = scmp.ne.s32.totalorder %s30, %s33
      %p42 = scmp.eq.s32.totalorder %s25, 1
      %p43 = por %p41, %p42
      %p44 = scmp.ne.s32.totalorder %s33, %s34
      %p45 = scmp.eq.s32.totalorder %s25, 0
      %p46 = por %p44, %p45
      %p47 = scmp.ne.s32.totalorder %s33, %s34
      %p48 = scmp.eq.s32.totalorder %s26, 1
      %p49 = por %p47, %p48
      %p51 = scmp.ne.s32.totalorder %s34, %s50
      %p52 = scmp.eq.s32.totalorder %s26, 0
      %p53 = por %p51, %p52
      %s55 = sadd.s32 %s54, 1
      %p58 = scmp.eq.s32.totalorder %s20, 1
      %p59 = scmp.ne.s32.totalorder %s54, %s56
      %p60 = scmp.eq.s32.totalorder %s20, 0
      %p61 = por %p59, %p60
      %p62 = scmp.ne.s32.totalorder %s54, %s56
      %p63 = scmp.eq.s32.totalorder %s25, 1
      %p64 = por %p62, %p63
      %p65 = scmp.ne.s32.totalorder %s56, %s57
      %p66 = scmp.eq.s32.totalorder %s25, 0
      %p67 = por %p65, %p66
      %p68 = scmp.ne.s32.totalorder %s56, %s57
      %p69 = scmp.eq.s32.totalorder %s26, 1
      %p70 = por %p68, %p69
      %p72 = scmp.ne.s32.totalorder %s57, %s71
      %p73 = scmp.eq.s32.totalorder %s26, 0
      %p74 = por %p72, %p73
      %s76 = sadd.s32 %s75, 1
      %p79 = scmp.eq.s32.totalorder %s20, 1
      %p80 = scmp.ne.s32.totalorder %s75, %s77
      %p81 = scmp.eq.s32.totalorder %s20, 0
      %p82 = por %p80, %p81
      %p83 = scmp.ne.s32.totalorder %s75, %s77
      %p84 = scmp.eq.s32.totalorder %s25, 1
      %p85 = por %p83, %p84
      %p86 = scmp.ne.s32.totalorder %s77, %s78
      %p87 = scmp.eq.s32.totalorder %s25, 0
      %p88 = por %p86, %p87
      %p89 = scmp.ne.s32.totalorder %s77, %s78
      %p90 = scmp.eq.s32.totalorder %s26, 1
      %p91 = por %p89, %p90
      %p93 = scmp.ne.s32.totalorder %s78, %s92
      %p94 = scmp.eq.s32.totalorder %s26, 0
      %p95 = por %p93, %p94
      %s97 = sadd.s32 %s96, 1
      %p100 = scmp.eq.s32.totalorder %s20, 1
      %p101 = scmp.ne.s32.totalorder %s96, %s98
      %p102 = scmp.eq.s32.totalorder %s20, 0
      %p103 = por %p101, %p102
      %p104 = scmp.ne.s32.totalorder %s96, %s98
      %p105 = scmp.eq.s32.totalorder %s25, 1
      %p106 = por %p104, %p105
      %p107 = scmp.ne.s32.totalorder %s98, %s99
      %p108 = scmp.eq.s32.totalorder %s25, 0
      %p109 = por %p107, %p108
      %p110 = scmp.ne.s32.totalorder %s98, %s99
      %p111 = scmp.eq.s32.totalorder %s26, 1
      %p112 = por %p110, %p111
      %p114 = scmp.ne.s32.totalorder %s99, %s113
      %p115 = scmp.eq.s32.totalorder %s26, 0
      %p116 = por %p114, %p115
      %s118 = sadd.s32 %s117, 1
      %p121 = scmp.eq.s32.totalorder %s20, 1
      %p122 = scmp.ne.s32.totalorder %s117, %s119
      %p123 = scmp.eq.s32.totalorder %s20, 0
      %p124 = por %p122, %p123
      %p125 = scmp.ne.s32.totalorder %s117, %s119
      %p126 = scmp.eq.s32.totalorder %s25, 1
      %p127 = por %p125, %p126
      %p128 = scmp.ne.s32.totalorder %s119, %s120
      %p129 = scmp.eq.s32.totalorder %s25, 0
      %p130 = por %p128, %p129
      %p131 = scmp.ne.s32.totalorder %s119, %s120
      %p132 = scmp.eq.s32.totalorder %s26, 1
      %p133 = por %p131, %p132
      %p135 = scmp.ne.s32.totalorder %s120, %s134
      %p136 = scmp.eq.s32.totalorder %s26, 0
      %p137 = por %p135, %p136
      %s139 = sadd.s32 %s138, 1
      %p142 = scmp.eq.s32.totalorder %s20, 1
      %p143 = scmp.ne.s32.totalorder %s138, %s140
      %p144 = scmp.eq.s32.totalorder %s20, 0
      %p145 = por %p143, %p144
      %p146 = scmp.ne.s32.totalorder %s138, %s140
      %p147 = scmp.eq.s32.totalorder %s25, 1
      %p148 = por %p146, %p147
      %p149 = scmp.ne.s32.totalorder %s140, %s141
      %p150 = scmp.eq.s32.totalorder %s25, 0
      %p151 = por %p149, %p150
      %p152 = scmp.ne.s32.totalorder %s140, %s141
      %p153 = scmp.eq.s32.totalorder %s26, 1
      %p154 = por %p152, %p153
      %p156 = scmp.ne.s32.totalorder %s141, %s155
      %p157 = scmp.eq.s32.totalorder %s26, 0
      %p158 = por %p156, %p157
      %s160 = sadd.s32 %s159, 1
      %p163 = scmp.eq.s32.totalorder %s20, 1
      %p164 = scmp.ne.s32.totalorder %s159, %s161
      %p165 = scmp.eq.s32.totalorder %s20, 0
      %p166 = por %p164, %p165
      %p167 = scmp.ne.s32.totalorder %s159, %s161
      %p168 = scmp.eq.s32.totalorder %s25, 1
      %p169 = por %p167, %p168
      %p170 = scmp.ne.s32.totalorder %s161, %s162
      %p171 = scmp.eq.s32.totalorder %s25, 0
      %p172 = por %p170, %p171
      %p173 = scmp.ne.s32.totalorder %s161, %s162
      %p174 = scmp.eq.s32.totalorder %s26, 1
      %p175 = por %p173, %p174
      %p177 = scmp.ne.s32.totalorder %s162, %s176
      %p178 = scmp.eq.s32.totalorder %s26, 0
      %p179 = por %p177, %p178
      %s180 = ssub.s32 %s20, %s27
      %p181 = scmp.eq.s32.totalorder %s180, 0
      %s183 = sadd.s32 %s182, 1
      %s184 = scalar_select %p181, %s182, %s183
      %p187 = pneg %p181
      %p188 = scmp.eq.s32.totalorder %s20, 1
      %p189 = por %p187, %p188
      %p190 = scmp.ne.s32.totalorder %s182, %s185
      %p191 = scmp.eq.s32.totalorder %s20, 0
      %p192 = por %p190, %p191
      %p193 = scmp.ne.s32.totalorder %s182, %s185
      %p194 = scmp.eq.s32.totalorder %s25, 1
      %p195 = por %p193, %p194
      %p196 = scmp.ne.s32.totalorder %s185, %s186
      %p197 = scmp.eq.s32.totalorder %s25, 0
      %p198 = por %p196, %p197
      %p199 = scmp.ne.s32.totalorder %s185, %s186
      %p200 = scmp.eq.s32.totalorder %s26, 1
      %p201 = por %p199, %p200
      %p203 = scmp.ne.s32.totalorder %s186, %s202
      %p204 = scmp.eq.s32.totalorder %s26, 0
      %p205 = por %p203, %p204
      %p206 = scmp.le.s32.totalorder 1, %s20
      %p207 = scmp.lt.s32.totalorder %s20, 3
      %p208 = pnand %p206, %p207
      %p209 = pneg %p208
      // Predicated region
      $region9: #{tpu_custom_call.1} parent=5 // pred_check
        _
      $region10: #{tpu_custom_call.1} parent=5 // pred_check_branch
        %211 = sbr.rel (%p208) target = $region12
      $region11: #{tpu_custom_call.1} parent=5 // pred_region
        %s212 = ssub.s32 %s20, 1
        // Predicated region
        $region13: #{tpu_custom_call.1} parent=11 // pred_check
          %p213 = pneg %p67
        $region14: #{tpu_custom_call.1} parent=11 // pred_check_branch
          %215 = sbr.rel (%p213) target = $region16
        $region15: #{tpu_custom_call.1} parent=11 // pred_region
          _
        $region16: #{tpu_custom_call.1} parent=11 // pred_fallthru
          _
        // Predicated region
        $region17: #{tpu_custom_call.1} parent=11 // pred_check
          %p216 = pneg %p88
        $region18: #{tpu_custom_call.1} parent=11 // pred_check_branch
          %218 = sbr.rel (%p216) target = $region20
        $region19: #{tpu_custom_call.1} parent=11 // pred_region
          _
        $region20: #{tpu_custom_call.1} parent=11 // pred_fallthru
          _
        // Predicated region
        $region21: #{tpu_custom_call.1} parent=11 // pred_check
          %p219 = pneg %p109
        $region22: #{tpu_custom_call.1} parent=11 // pred_check_branch
          %221 = sbr.rel (%p219) target = $region24
        $region23: #{tpu_custom_call.1} parent=11 // pred_region
          %s223 = ssub.s32 3072, 3072
          %224 = vsyncadd [#allocation6], %s223
          %s225 = sshll.u32 [#allocation5], 4
          %s226 = int_to_ptr.vmem [resolvable:$true] %s225
          %231 = dma.hbm_to_vmem [thread:$0]  %s3, 3072, %s226, [#allocation6], 128, 128, 8
        $region24: #{tpu_custom_call.1} parent=11 // pred_fallthru
          _
        // Predicated region
        $region25: #{tpu_custom_call.1} parent=11 // pred_check
          %p232 = pneg %p130
        $region26: #{tpu_custom_call.1} parent=11 // pred_check_branch
          %234 = sbr.rel (%p232) target = $region28
        $region27: #{tpu_custom_call.1} parent=11 // pred_region
          _
        $region28: #{tpu_custom_call.1} parent=11 // pred_fallthru
          _
        // Predicated region
        $region29: #{tpu_custom_call.1} parent=11 // pred_check
          %p235 = pneg %p151
        $region30: #{tpu_custom_call.1} parent=11 // pred_check_branch
          %237 = sbr.rel (%p235) target = $region32
        $region31: #{tpu_custom_call.1} parent=11 // pred_region
          _
        $region32: #{tpu_custom_call.1} parent=11 // pred_fallthru
          _
        // Predicated region
        $region33: #{tpu_custom_call.1} parent=11 // pred_check
          %p238 = pneg %p172
        $region34: #{tpu_custom_call.1} parent=11 // pred_check_branch
          %240 = sbr.rel (%p238) target = $region36
        $region35: #{tpu_custom_call.1} parent=11 // pred_region
          %s242 = ssub.s32 3072, 3072
          %243 = vsyncadd [#allocation6], %s242
          %s244 = sshll.u32 [#allocation7], 4
          %s245 = int_to_ptr.vmem [resolvable:$true] %s244
          %250 = dma.hbm_to_vmem [thread:$0]  %s6, 3072, %s245, [#allocation6], 64, 64, 4
        $region36: #{tpu_custom_call.1} parent=11 // pred_fallthru
          _
      $region12: #{tpu_custom_call.1} parent=5 // pred_fallthru
        _
      %p251 = scmp.lt.s32.totalorder %s20, 2
      // Predicated region
      $region37: #{tpu_custom_call.1} parent=5 // pred_check
        %p252 = pneg %p251
      $region38: #{tpu_custom_call.1} parent=5 // pred_check_branch
        %254 = sbr.rel (%p252) target = $region40
      $region39: #{tpu_custom_call.1} parent=5 // pred_region
        // Predicated region
        $region41: #{tpu_custom_call.1} parent=39 // pred_check
          %p255 = pneg %p40
        $region42: #{tpu_custom_call.1} parent=39 // pred_check_branch
          %257 = sbr.rel (%p255) target = $region44
        $region43: #{tpu_custom_call.1} parent=39 // pred_region
          %s258 = sand.u32 %s30, 1
          %s259 = scalar_lea.sflag [#allocation3], %s258
          %s260 = sand.u32 %s30, 1
          %s261 = smul.addr %s260, 16
          %s262 = scalar_lea.vmem [#allocation2], %s261
          %s263 = smul.u32 2, %s20
          %s265 = ssub.s32 256, 256
          %266 = vsyncadd %s259, %s265
          %s267 = smul.addr %s263, 128
          %s268 = scalar_lea.hbm %s0, %s267
          %s269 = sshll.u32 %s262, 4
          %s270 = int_to_ptr.vmem [resolvable:$true] %s269
          %275 = dma.hbm_to_vmem [thread:$0]  %s268, 256, %s270, %s259, 128, 128, 8
        $region44: #{tpu_custom_call.1} parent=39 // pred_fallthru
          _
      $region40: #{tpu_custom_call.1} parent=5 // pred_fallthru
        _
      %p276 = scmp.le.s32.totalorder 1, %s20
      %p277 = scmp.lt.s32.totalorder %s20, 3
      %p278 = pnand %p276, %p277
      %p279 = pneg %p278
      // Predicated region
      $region45: #{tpu_custom_call.1} parent=5 // pred_check
        _
      $region46: #{tpu_custom_call.1} parent=5 // pred_check_branch
        %281 = sbr.rel (%p278) target = $region48
      $region47: #{tpu_custom_call.1} parent=5 // pred_region
        %s282 = ssub.s32 %s20, 1
        %s283 = sand.u32 %s33, 1
        %s284 = scalar_lea.sflag [#allocation3], %s283
        %s285 = sand.u32 %s33, 1
        %s286 = smul.addr %s285, 16
        %s287 = scalar_lea.vmem [#allocation2], %s286
        // Predicated region
        $region49: #{tpu_custom_call.1} parent=47 // pred_check
          %p288 = pneg %p46
        $region50: #{tpu_custom_call.1} parent=47 // pred_check_branch
          %290 = sbr.rel (%p288) target = $region52
        $region51: #{tpu_custom_call.1} parent=47 // pred_region
          %291 = dma.done %s284, 256
        $region52: #{tpu_custom_call.1} parent=47 // pred_fallthru
          _
        // Predicated region
        $region53: #{tpu_custom_call.1} parent=47 // pred_check
          %p292 = pneg %p109
        $region54: #{tpu_custom_call.1} parent=47 // pred_check_branch
          %294 = sbr.rel (%p292) target = $region56
        $region55: #{tpu_custom_call.1} parent=47 // pred_region
          %295 = dma.done [#allocation6], 3072
        $region56: #{tpu_custom_call.1} parent=47 // pred_fallthru
          _
        // Predicated region
        $region57: #{tpu_custom_call.1} parent=47 // pred_check
          %p296 = pneg %p172
        $region58: #{tpu_custom_call.1} parent=47 // pred_check_branch
          %298 = sbr.rel (%p296) target = $region60
        $region59: #{tpu_custom_call.1} parent=47 // pred_region
          %299 = dma.done [#allocation6], 3072
        $region60: #{tpu_custom_call.1} parent=47 // pred_fallthru
          _
        %s300 = sand.u32 %s33, 1
        %s301 = scalar_lea.sflag [#allocation3], %s300
        %s302 = sand.u32 %s33, 1
        %s303 = smul.addr %s302, 16
        %s304 = scalar_lea.vmem [#allocation2], %s303
        %p305 = pneg %p46
        %p306 = pneg %p43
        %p307 = pneg %p67
        %p308 = pneg %p64
        %p309 = pneg %p88
        %p310 = pneg %p85
        %p311 = pneg %p109
        %p312 = pneg %p106
        %p313 = pneg %p130
        %p314 = pneg %p127
        %p315 = pneg %p151
        %p316 = pneg %p148
        %p317 = pneg %p172
        %p318 = pneg %p169
        %p319 = pneg %p198
        %p320 = pneg %p195
        %s321 = sand.u32 %s185, 1
        %s322 = scalar_lea.sflag [#allocation4], %s321
        %s323 = sand.u32 %s185, 1
        %s324 = smul.addr %s323, 16
        %s325 = scalar_lea.vmem [#allocation8], %s324
        %s326 = smul.u32 2, %s25
        %s327 = smul.u32 2, %s25
        %v329 = vlaneseq
        %v330 = vshrl.u32 %v329, 7
        %v331 = vadd.s32 %v330, 8
        %vm332 = vcmp.lt.s32.totalorder %v330, 0
        %v333 = vsub.s32 0, %v330
        %v334 = vsel %vm332, %v333, %v330
        %v335 = vshrl.u32 %v334, 4
        %v336 = vand.u32 %v334, 15
        %v337 = vsub.s32 0, %v336
        %v338 = vsel %vm332, %v337, %v336
        %vm339 = vcmp.lt.s32.totalorder %v331, 0
        %v340 = vsub.s32 0, %v331
        %v341 = vsel %vm339, %v340, %v331
        %v342 = vshrl.u32 %v341, 4
        %v343 = vand.u32 %v341, 15
        %v344 = vsub.s32 0, %v343
        %v345 = vsel %vm339, %v344, %v343
        %vm346 = vcmp.ne.s32.totalorder %v338, 0
        %vm347 = vcmp.ne.s32.totalorder %v345, 0
        %vm348 = vcmp.lt.s32.totalorder %v338, 0
        %vm349 = vcmp.lt.s32.totalorder %v345, 0
        %vm350 = vmand %vm348, %vm346
        %vm351 = vmand %vm349, %vm347
        %v352 = vadd.s32 %v338, 16
        %v353 = vadd.s32 %v345, 16
        %v354 = vsel %vm350, %v352, %v338
        %v355 = vsel %vm351, %v353, %v345
        %vm356 = vcmp.ne.s32.totalorder %v354, 0
        %vm357 = vcmp.ne.s32.totalorder %v355, 0
        %vm358 = vcmp.ne.s32.totalorder %v354, 15
        %vm359 = vcmp.ne.s32.totalorder %v355, 15
        %v360 = vld [vmem:[%s287] sm:$0xff]
        %v361 = vld [vmem:[%s287 + $0x8] sm:$0xff]
        %v362 = vld [vmem:[%s1] sm:$0x1]
        %v364 = vlaneseq
        %v365 = vshrl.u32 %v364, 7
        %v366 = vsub.s32 0, %v365
        %v367 = vrot.slane %v362, %v366
        %v369 = vmul.f32 %v360, %v367
        %v370 = vmul.f32 %v361, %v367
        %v371 = vld [vmem:[%s2] sm:$0x1]
        %v373 = vlaneseq
        %v374 = vshrl.u32 %v373, 7
        %v375 = vsub.s32 0, %v374
        %v376 = vrot.slane %v371, %v375
        %v378 = vadd.f32 %v369, %v376
        %v379 = vadd.f32 %v370, %v376
        %v380 = vmax.f32 %v378, 0.0
        %v381 = vmax.f32 %v379, 0.0
        %v382 = vrot.slane %v380, 7
        %v383 = vrot.slane %v381, 7
        %vm384 = vcmp.lt.s32.totalorder %v330, 1
        %v385 = vsel %vm384, %v382, %v383
        %v386 = vsel %vm384, %v383, %v382
        %v387 = vsel %vm356, 1, 0
        %v388 = vsel %vm357, 1, 0
        %vm389 = vcmp.eq.s32.totalorder %v387, 1
        %vm390 = vcmp.eq.s32.totalorder %v388, 1
        %v391 = vsel %vm389, %v386, 0.0
        %v392 = vsel %vm390, %v385, 0.0
        %v393 = vrot.slane %v380, 1
        %v394 = vrot.slane %v381, 1
        %vm395 = vcmp.lt.s32.totalorder %v330, 7
        %v396 = vsel %vm395, %v393, %v394
        %v397 = vsel %vm395, %v394, %v393
        %v398 = vsel %vm358, 1, 0
        %v399 = vsel %vm359, 1, 0
        %vm400 = vcmp.eq.s32.totalorder %v398, 1
        %vm401 = vcmp.eq.s32.totalorder %v399, 1
        %v402 = vsel %vm400, %v396, 0.0
        %v403 = vsel %vm401, %v397, 0.0
        %406 = vrot.lane.b32.xlu0 %v380, 64
        %v407 = vpop.permute.xlu0 %406
        %408 = vrot.lane.b32.xlu0 %v381, 64
        %v409 = vpop.permute.xlu0 %408
        %vm412 = vcmask 523264
        %v413 = vsel %vm412, %v391, %v407
        %v414 = vsel %vm412, %v392, %v409
        %v415 = vpack.c.bf16 %v414, %v413
        %v416 = vpack.c.bf16 %v403, %v402
        %v417 = vld [vmem:[#allocation5] sm:$0xff]
        %v418 = vld [vmem:[#allocation5 + $0x8] sm:$0xff]
        %v419 = vld [vmem:[#allocation5 + $0x10] sm:$0xff]
        %v420 = vld [vmem:[#allocation5 + $0x18] sm:$0xff]
        %v421 = vld [vmem:[#allocation5 + $0x20] sm:$0xff]
        %v422 = vld [vmem:[#allocation5 + $0x28] sm:$0xff]
        %v423 = vld [vmem:[#allocation5 + $0x30] sm:$0xff]
        %v424 = vld [vmem:[#allocation5 + $0x38] sm:$0xff]
        %v425 = vld [vmem:[#allocation5 + $0x40] sm:$0xff]
        %v426 = vld [vmem:[#allocation5 + $0x48] sm:$0xff]
        %v427 = vld [vmem:[#allocation5 + $0x50] sm:$0xff]
        %v428 = vld [vmem:[#allocation5 + $0x58] sm:$0xff]
        %v429 = vld [vmem:[#allocation5 + $0x60] sm:$0xff]
        %v430 = vld [vmem:[#allocation5 + $0x68] sm:$0xff]
        %v431 = vld [vmem:[#allocation5 + $0x70] sm:$0xff]
        %v432 = vld [vmem:[#allocation5 + $0x78] sm:$0xff]
        %v433 = vld [vmem:[#allocation5 + $0x80] sm:$0xff]
        %v434 = vld [vmem:[#allocation5 + $0x88] sm:$0xff]
        %v435 = vld [vmem:[#allocation5 + $0x90] sm:$0xff]
        %v436 = vld [vmem:[#allocation5 + $0x98] sm:$0xff]
        %v437 = vld [vmem:[#allocation5 + $0xa0] sm:$0xff]
        %v438 = vld [vmem:[#allocation5 + $0xa8] sm:$0xff]
        %v439 = vld [vmem:[#allocation5 + $0xb0] sm:$0xff]
        %v440 = vld [vmem:[#allocation5 + $0xb8] sm:$0xff]
        %v465 = vunpack.c.l.b16 %v417
        %v466 = vunpack.c.h.b16 %v417
        %v467 = vunpack.c.l.b16 %v418
        %v468 = vunpack.c.h.b16 %v418
        %v469 = vunpack.c.l.b16 %v419
        %v470 = vunpack.c.h.b16 %v419
        %v471 = vunpack.c.l.b16 %v420
        %v472 = vunpack.c.h.b16 %v420
        %v473 = vunpack.c.l.b16 %v421
        %v474 = vunpack.c.h.b16 %v421
        %v475 = vunpack.c.l.b16 %v422
        %v476 = vunpack.c.h.b16 %v422
        %v477 = vunpack.c.l.b16 %v423
        %v478 = vunpack.c.h.b16 %v423
        %v479 = vunpack.c.l.b16 %v424
        %v480 = vunpack.c.h.b16 %v424
        %v481 = vunpack.c.l.b16 %v425
        %v482 = vunpack.c.h.b16 %v425
        %v483 = vunpack.c.l.b16 %v426
        %v484 = vunpack.c.h.b16 %v426
        %v485 = vunpack.c.l.b16 %v427
        %v486 = vunpack.c.h.b16 %v427
        %v487 = vunpack.c.l.b16 %v428
        %v488 = vunpack.c.h.b16 %v428
        %v489 = vunpack.c.l.b16 %v429
        %v490 = vunpack.c.h.b16 %v429
        %v491 = vunpack.c.l.b16 %v430
        %v492 = vunpack.c.h.b16 %v430
        %v493 = vunpack.c.l.b16 %v431
        %v494 = vunpack.c.h.b16 %v431
        %v495 = vunpack.c.l.b16 %v432
        %v496 = vunpack.c.h.b16 %v432
        %v497 = vunpack.c.l.b16 %v433
        %v498 = vunpack.c.h.b16 %v433
        %v499 = vunpack.c.l.b16 %v434
        %v500 = vunpack.c.h.b16 %v434
        %v501 = vunpack.c.l.b16 %v435
        %v502 = vunpack.c.h.b16 %v435
        %v503 = vunpack.c.l.b16 %v436
        %v504 = vunpack.c.h.b16 %v436
        %v505 = vunpack.c.l.b16 %v437
        %v506 = vunpack.c.h.b16 %v437
        %v507 = vunpack.c.l.b16 %v438
        %v508 = vunpack.c.h.b16 %v438
        %v509 = vunpack.c.l.b16 %v439
        %v510 = vunpack.c.h.b16 %v439
        %v511 = vunpack.c.l.b16 %v440
        %v512 = vunpack.c.h.b16 %v440
        %v513 = vpack.c.b16 %v467, %v465
        %v514 = vpack.c.b16 %v468, %v466
        %v515 = vpack.c.b16 %v471, %v469
        %v516 = vpack.c.b16 %v472, %v470
        %v517 = vpack.c.b16 %v475, %v473
        %v518 = vpack.c.b16 %v476, %v474
        %v519 = vpack.c.b16 %v479, %v477
        %v520 = vpack.c.b16 %v480, %v478
        %v521 = vpack.c.b16 %v483, %v481
        %v522 = vpack.c.b16 %v484, %v482
        %v523 = vpack.c.b16 %v487, %v485
        %v524 = vpack.c.b16 %v488, %v486
        %v525 = vpack.c.b16 %v491, %v489
        %v526 = vpack.c.b16 %v492, %v490
        %v527 = vpack.c.b16 %v495, %v493
        %v528 = vpack.c.b16 %v496, %v494
        %v529 = vpack.c.b16 %v499, %v497
        %v530 = vpack.c.b16 %v500, %v498
        %v531 = vpack.c.b16 %v503, %v501
        %v532 = vpack.c.b16 %v504, %v502
        %v533 = vpack.c.b16 %v507, %v505
        %v534 = vpack.c.b16 %v508, %v506
        %v535 = vpack.c.b16 %v511, %v509
        %v536 = vpack.c.b16 %v512, %v510
        %v562 = vsel %vm412, %v416, 0
        %564 = vmatprep.subr.bf16.mxu0 %v514
        %565 = vmatpush1.bf16.msra.mxu0 %v513
        %566 = vmatprep.subr.bf16.mxu0 %v516
        %567 = vmatpush1.bf16.msra.mxu0 %v515
        %568 = vmatprep.subr.bf16.mxu0 %v518
        %569 = vmatpush1.bf16.msra.mxu0 %v517
        %570 = vmatprep.subr.bf16.mxu0 %v520
        %571 = vmatpush1.bf16.msra.mxu0 %v519
        %572 = vmatprep.subr.bf16.mxu0 %v522
        %573 = vmatpush1.bf16.msra.mxu0 %v521
        %574 = vmatprep.subr.bf16.mxu0 %v524
        %575 = vmatpush1.bf16.msra.mxu0 %v523
        %576 = vmatprep.subr.bf16.mxu0 %v526
        %577 = vmatpush1.bf16.msra.mxu0 %v525
        %578 = vmatprep.subr.bf16.mxu0 %v528
        %579 = vmatpush1.bf16.msra.mxu0 %v527
        %580 = vmatprep.subr.bf16.mxu0 %v530
        %581 = vmatpush1.bf16.msra.mxu0 %v529
        %582 = vmatprep.subr.bf16.mxu0 %v532
        %583 = vmatpush1.bf16.msra.mxu0 %v531
        %584 = vmatprep.subr.bf16.mxu0 %v534
        %585 = vmatpush1.bf16.msra.mxu0 %v533
        %586 = vmatprep.subr.bf16.mxu0 %v536
        %587 = vmatpush1.bf16.msra.mxu0 %v535
        %588 = vmatprep.subr.bf16.mxu0 0
        %589 = vmatpush1.bf16.msra.mxu0 0
        %590 = vmatprep.subr.bf16.mxu0 0
        %591 = vmatpush1.bf16.msra.mxu0 0
        %592 = vmatprep.subr.bf16.mxu0 0
        %593 = vmatpush1.bf16.msra.mxu0 0
        %594 = vmatprep.subr.bf16.mxu0 0
        %595 = vmatpush1.bf16.msra.mxu0 0
        %596 = vmatprep.mubr.bf16.mxu0 %v562
        %597 = vmatmul.mubr.bf16.gmra.mrb[0].mxu0 %v415
        %v598 = vpop.f32.mrb[0].mxu0
        %v599 = vadd.f32 0.0, %v598
        %v600 = vpop.f32.mrb[0].mxu0
        %v601 = vadd.f32 0.0, %v600
        %v602 = vpop.f32.mrb[0].mxu0
        %v603 = vadd.f32 0.0, %v602
        %v604 = vpop.f32.mrb[0].mxu0
        %v605 = vadd.f32 0.0, %v604
        %606 = vdwg.mxu0
        %v607 = vld [vmem:[%s4] sm:$0x1]
        %v609 = vlaneseq
        %v610 = vshrl.u32 %v609, 7
        %v611 = vsub.s32 0, %v610
        %v612 = vrot.slane %v607, %v611
        %v614 = vmul.f32 %v599, %v612
        %v615 = vmul.f32 %v603, %v612
        %v616 = vld [vmem:[%s5] sm:$0x1]
        %v618 = vlaneseq
        %v619 = vshrl.u32 %v618, 7
        %v620 = vsub.s32 0, %v619
        %v621 = vrot.slane %v616, %v620
        %v623 = vadd.f32 %v614, %v621
        %v624 = vadd.f32 %v615, %v621
        %v625 = vmax.f32 %v623, 0.0
        %v626 = vmax.f32 %v624, 0.0
        %v627 = vrot.slane %v625, 7
        %v628 = vrot.slane %v626, 7
        %v629 = vsel %vm384, %v627, %v628
        %v630 = vsel %vm384, %v628, %v627
        %v631 = vsel %vm389, %v630, 0.0
        %v632 = vsel %vm390, %v629, 0.0
        %v633 = vrot.slane %v625, 1
        %v634 = vrot.slane %v626, 1
        %v635 = vsel %vm395, %v633, %v634
        %v636 = vsel %vm395, %v634, %v633
        %v637 = vsel %vm400, %v635, 0.0
        %v638 = vsel %vm401, %v636, 0.0
        %v639 = vpack.c.bf16 %v632, %v631
        %v640 = vpack.c.bf16 %v626, %v625
        %v641 = vpack.c.bf16 %v638, %v637
        %v642 = vld [vmem:[#allocation7] sm:$0xf]
        %v643 = vld [vmem:[#allocation7 + $0x4] sm:$0xf]
        %v644 = vld [vmem:[#allocation7 + $0x8] sm:$0xf]
        %v645 = vld [vmem:[#allocation7 + $0xc] sm:$0xf]
        %v646 = vld [vmem:[#allocation7 + $0x10] sm:$0xf]
        %v647 = vld [vmem:[#allocation7 + $0x14] sm:$0xf]
        %v648 = vld [vmem:[#allocation7 + $0x18] sm:$0xf]
        %v649 = vld [vmem:[#allocation7 + $0x1c] sm:$0xf]
        %v650 = vld [vmem:[#allocation7 + $0x20] sm:$0xf]
        %v651 = vld [vmem:[#allocation7 + $0x24] sm:$0xf]
        %v652 = vld [vmem:[#allocation7 + $0x28] sm:$0xf]
        %v653 = vld [vmem:[#allocation7 + $0x2c] sm:$0xf]
        %v654 = vld [vmem:[#allocation7 + $0x30] sm:$0xf]
        %v655 = vld [vmem:[#allocation7 + $0x34] sm:$0xf]
        %v656 = vld [vmem:[#allocation7 + $0x38] sm:$0xf]
        %v657 = vld [vmem:[#allocation7 + $0x3c] sm:$0xf]
        %v658 = vld [vmem:[#allocation7 + $0x40] sm:$0xf]
        %v659 = vld [vmem:[#allocation7 + $0x44] sm:$0xf]
        %v660 = vld [vmem:[#allocation7 + $0x48] sm:$0xf]
        %v661 = vld [vmem:[#allocation7 + $0x4c] sm:$0xf]
        %v662 = vld [vmem:[#allocation7 + $0x50] sm:$0xf]
        %v663 = vld [vmem:[#allocation7 + $0x54] sm:$0xf]
        %v664 = vld [vmem:[#allocation7 + $0x58] sm:$0xf]
        %v665 = vld [vmem:[#allocation7 + $0x5c] sm:$0xf]
        %v666 = vld [vmem:[#allocation7 + $0x60] sm:$0xf]
        %v667 = vld [vmem:[#allocation7 + $0x64] sm:$0xf]
        %v668 = vld [vmem:[#allocation7 + $0x68] sm:$0xf]
        %v669 = vld [vmem:[#allocation7 + $0x6c] sm:$0xf]
        %v670 = vld [vmem:[#allocation7 + $0x70] sm:$0xf]
        %v671 = vld [vmem:[#allocation7 + $0x74] sm:$0xf]
        %v672 = vld [vmem:[#allocation7 + $0x78] sm:$0xf]
        %v673 = vld [vmem:[#allocation7 + $0x7c] sm:$0xf]
        %v674 = vld [vmem:[#allocation7 + $0x80] sm:$0xf]
        %v675 = vld [vmem:[#allocation7 + $0x84] sm:$0xf]
        %v676 = vld [vmem:[#allocation7 + $0x88] sm:$0xf]
        %v677 = vld [vmem:[#allocation7 + $0x8c] sm:$0xf]
        %v678 = vld [vmem:[#allocation7 + $0x90] sm:$0xf]
        %v679 = vld [vmem:[#allocation7 + $0x94] sm:$0xf]
        %v680 = vld [vmem:[#allocation7 + $0x98] sm:$0xf]
        %v681 = vld [vmem:[#allocation7 + $0x9c] sm:$0xf]
        %v682 = vld [vmem:[#allocation7 + $0xa0] sm:$0xf]
        %v683 = vld [vmem:[#allocation7 + $0xa4] sm:$0xf]
        %v684 = vld [vmem:[#allocation7 + $0xa8] sm:$0xf]
        %v685 = vld [vmem:[#allocation7 + $0xac] sm:$0xf]
        %v686 = vld [vmem:[#allocation7 + $0xb0] sm:$0xf]
        %v687 = vld [vmem:[#allocation7 + $0xb4] sm:$0xf]
        %v688 = vld [vmem:[#allocation7 + $0xb8] sm:$0xf]
        %v689 = vld [vmem:[#allocation7 + $0xbc] sm:$0xf]
        %v738 = vunpack.c.l.b16 %v642
        %v739 = vunpack.c.l.b16 %v643
        %v740 = vunpack.c.l.b16 %v644
        %v741 = vunpack.c.l.b16 %v645
        %v742 = vunpack.c.l.b16 %v646
        %v743 = vunpack.c.l.b16 %v647
        %v744 = vunpack.c.l.b16 %v648
        %v745 = vunpack.c.l.b16 %v649
        %v746 = vunpack.c.l.b16 %v650
        %v747 = vunpack.c.l.b16 %v651
        %v748 = vunpack.c.l.b16 %v652
        %v749 = vunpack.c.l.b16 %v653
        %v750 = vunpack.c.l.b16 %v654
        %v751 = vunpack.c.l.b16 %v655
        %v752 = vunpack.c.l.b16 %v656
        %v753 = vunpack.c.l.b16 %v657
        %v754 = vunpack.c.l.b16 %v658
        %v755 = vunpack.c.l.b16 %v659
        %v756 = vunpack.c.l.b16 %v660
        %v757 = vunpack.c.l.b16 %v661
        %v758 = vunpack.c.l.b16 %v662
        %v759 = vunpack.c.l.b16 %v663
        %v760 = vunpack.c.l.b16 %v664
        %v761 = vunpack.c.l.b16 %v665
        %v762 = vunpack.c.l.b16 %v666
        %v763 = vunpack.c.l.b16 %v667
        %v764 = vunpack.c.l.b16 %v668
        %v765 = vunpack.c.l.b16 %v669
        %v766 = vunpack.c.l.b16 %v670
        %v767 = vunpack.c.l.b16 %v671
        %v768 = vunpack.c.l.b16 %v672
        %v769 = vunpack.c.l.b16 %v673
        %v770 = vunpack.c.l.b16 %v674
        %v771 = vunpack.c.l.b16 %v675
        %v772 = vunpack.c.l.b16 %v676
        %v773 = vunpack.c.l.b16 %v677
        %v774 = vunpack.c.l.b16 %v678
        %v775 = vunpack.c.l.b16 %v679
        %v776 = vunpack.c.l.b16 %v680
        %v777 = vunpack.c.l.b16 %v681
        %v778 = vunpack.c.l.b16 %v682
        %v779 = vunpack.c.l.b16 %v683
        %v780 = vunpack.c.l.b16 %v684
        %v781 = vunpack.c.l.b16 %v685
        %v782 = vunpack.c.l.b16 %v686
        %v783 = vunpack.c.l.b16 %v687
        %v784 = vunpack.c.l.b16 %v688
        %v785 = vunpack.c.l.b16 %v689
        %v786 = vpack.c.b16 %v739, %v738
        %v787 = vpack.c.b16 %v741, %v740
        %v788 = vpack.c.b16 %v743, %v742
        %v789 = vpack.c.b16 %v745, %v744
        %v790 = vpack.c.b16 %v747, %v746
        %v791 = vpack.c.b16 %v749, %v748
        %v792 = vpack.c.b16 %v751, %v750
        %v793 = vpack.c.b16 %v753, %v752
        %v794 = vpack.c.b16 %v755, %v754
        %v795 = vpack.c.b16 %v757, %v756
        %v796 = vpack.c.b16 %v759, %v758
        %v797 = vpack.c.b16 %v761, %v760
        %v798 = vpack.c.b16 %v763, %v762
        %v799 = vpack.c.b16 %v765, %v764
        %v800 = vpack.c.b16 %v767, %v766
        %v801 = vpack.c.b16 %v769, %v768
        %v802 = vpack.c.b16 %v771, %v770
        %v803 = vpack.c.b16 %v773, %v772
        %v804 = vpack.c.b16 %v775, %v774
        %v805 = vpack.c.b16 %v777, %v776
        %v806 = vpack.c.b16 %v779, %v778
        %v807 = vpack.c.b16 %v781, %v780
        %v808 = vpack.c.b16 %v783, %v782
        %v809 = vpack.c.b16 %v785, %v784
        %834 = vmatprep.subr.bf16.mxu0 0
        %835 = vmatpush1.bf16.msra.mxu0 %v786
        %836 = vmatprep.subr.bf16.mxu0 0
        %837 = vmatpush1.bf16.msra.mxu0 %v787
        %838 = vmatprep.subr.bf16.mxu0 0
        %839 = vmatpush1.bf16.msra.mxu0 %v788
        %840 = vmatprep.subr.bf16.mxu0 0
        %841 = vmatpush1.bf16.msra.mxu0 %v789
        %842 = vmatprep.subr.bf16.mxu0 0
        %843 = vmatpush1.bf16.msra.mxu0 %v790
        %844 = vmatprep.subr.bf16.mxu0 0
        %845 = vmatpush1.bf16.msra.mxu0 %v791
        %846 = vmatprep.subr.bf16.mxu0 0
        %847 = vmatpush1.bf16.msra.mxu0 %v792
        %848 = vmatprep.subr.bf16.mxu0 0
        %849 = vmatpush1.bf16.msra.mxu0 %v793
        %850 = vmatprep.subr.bf16.mxu0 0
        %851 = vmatpush1.bf16.msra.mxu0 %v794
        %852 = vmatprep.subr.bf16.mxu0 0
        %853 = vmatpush1.bf16.msra.mxu0 %v795
        %854 = vmatprep.subr.bf16.mxu0 0
        %855 = vmatpush1.bf16.msra.mxu0 %v796
        %856 = vmatprep.subr.bf16.mxu0 0
        %857 = vmatpush1.bf16.msra.mxu0 %v797
        %858 = vmatprep.subr.bf16.mxu0 0
        %859 = vmatpush1.bf16.msra.mxu0 %v798
        %860 = vmatprep.subr.bf16.mxu0 0
        %861 = vmatpush1.bf16.msra.mxu0 %v799
        %862 = vmatprep.subr.bf16.mxu0 0
        %863 = vmatpush1.bf16.msra.mxu0 %v800
        %864 = vmatprep.subr.bf16.mxu0 0
        %865 = vmatpush1.bf16.msra.mxu0 %v801
        %866 = vmatprep.mubr.bf16.mxu0 %v640
        %867 = vmatmul.mubr.bf16.gmra.mrb[0].mxu0 %v639
        %v868 = vpop.f32.mrb[0].mxu0
        %v869 = vadd.f32 %v601, %v868
        %v870 = vpop.f32.mrb[0].mxu0
        %v871 = vpop.f32.mrb[0].mxu0
        %v872 = vadd.f32 %v605, %v871
        %v873 = vpop.f32.mrb[0].mxu0
        %874 = vdwg.mxu0
        %875 = vmatprep.subr.bf16.mxu0 0
        %876 = vmatpush1.bf16.msra.mxu0 %v802
        %877 = vmatprep.subr.bf16.mxu0 0
        %878 = vmatpush1.bf16.msra.mxu0 %v803
        %879 = vmatprep.subr.bf16.mxu0 0
        %880 = vmatpush1.bf16.msra.mxu0 %v804
        %881 = vmatprep.subr.bf16.mxu0 0
        %882 = vmatpush1.bf16.msra.mxu0 %v805
        %883 = vmatprep.subr.bf16.mxu0 0
        %884 = vmatpush1.bf16.msra.mxu0 %v806
        %885 = vmatprep.subr.bf16.mxu0 0
        %886 = vmatpush1.bf16.msra.mxu0 %v807
        %887 = vmatprep.subr.bf16.mxu0 0
        %888 = vmatpush1.bf16.msra.mxu0 %v808
        %889 = vmatprep.subr.bf16.mxu0 0
        %890 = vmatpush1.bf16.msra.mxu0 %v809
        %891 = vmatprep.subr.bf16.mxu0 0
        %892 = vmatpush1.bf16.msra.mxu0 0
        %893 = vmatprep.subr.bf16.mxu0 0
        %894 = vmatpush1.bf16.msra.mxu0 0
        %895 = vmatprep.subr.bf16.mxu0 0
        %896 = vmatpush1.bf16.msra.mxu0 0
        %897 = vmatprep.subr.bf16.mxu0 0
        %898 = vmatpush1.bf16.msra.mxu0 0
        %899 = vmatprep.subr.bf16.mxu0 0
        %900 = vmatpush1.bf16.msra.mxu0 0
        %901 = vmatprep.subr.bf16.mxu0 0
        %902 = vmatpush1.bf16.msra.mxu0 0
        %903 = vmatprep.subr.bf16.mxu0 0
        %904 = vmatpush1.bf16.msra.mxu0 0
        %905 = vmatprep.subr.bf16.mxu0 0
        %906 = vmatpush1.bf16.msra.mxu0 0
        %907 = vmatprep.mubr.bf16.mxu0 0
        %908 = vmatmul.mubr.bf16.gmra.mrb[0].mxu0 %v641
        %v909 = vpop.f32.mrb[0].mxu0
        %v910 = vadd.f32 %v869, %v909
        %v911 = vpop.f32.mrb[0].mxu0
        %v912 = vpop.f32.mrb[0].mxu0
        %v913 = vadd.f32 %v872, %v912
        %v914 = vpop.f32.mrb[0].mxu0
        %915 = vdwg.mxu0
        %916 = vst [vmem:[%s325] sm:$0xff] %v910
        %917 = vst [vmem:[%s325 + $0x8] sm:$0xff] %v913
        %s918 = sand.u32 %s185, 1
        %s919 = scalar_lea.sflag [#allocation4], %s918
        %s920 = sand.u32 %s185, 1
        %s921 = smul.addr %s920, 16
        %s922 = scalar_lea.vmem [#allocation8], %s921
        // Predicated region
        $region61: #{tpu_custom_call.1} parent=47 // pred_check
          %p923 = pneg %p195
        $region62: #{tpu_custom_call.1} parent=47 // pred_check_branch
          %925 = sbr.rel (%p923) target = $region64
        $region63: #{tpu_custom_call.1} parent=47 // pred_region
          %s926 = smul.u32 2, %s25
          %s928 = ssub.s32 256, 256
          %929 = vsyncadd %s919, %s928
          %s930 = smul.addr %s926, 128
          %s931 = scalar_lea.hbm %s7, %s930
          %s932 = sshll.u32 %s922, 4
          %s933 = int_to_ptr.vmem [resolvable:$true] %s932
          %938 = dma.vmem_to_hbm [thread:$0]  %s933, 256, %s931, %s919, 128, 128, 8
        $region64: #{tpu_custom_call.1} parent=47 // pred_fallthru
          _
      $region48: #{tpu_custom_call.1} parent=5 // pred_fallthru
        _
      %p939 = scmp.le.s32.totalorder 2, %s20
      // Predicated region
      $region65: #{tpu_custom_call.1} parent=5 // pred_check
        %p940 = pneg %p939
      $region66: #{tpu_custom_call.1} parent=5 // pred_check_branch
        %942 = sbr.rel (%p940) target = $region68
      $region67: #{tpu_custom_call.1} parent=5 // pred_region
        %s943 = ssub.s32 %s20, 2
        // Predicated region
        $region69: #{tpu_custom_call.1} parent=67 // pred_check
          %p944 = pneg %p201
        $region70: #{tpu_custom_call.1} parent=67 // pred_check_branch
          %946 = sbr.rel (%p944) target = $region72
        $region71: #{tpu_custom_call.1} parent=67 // pred_region
          %s947 = sand.u32 %s186, 1
          %s948 = scalar_lea.sflag [#allocation4], %s947
          %s949 = sand.u32 %s186, 1
          %s950 = smul.addr %s949, 16
          %s951 = scalar_lea.vmem [#allocation8], %s950
          %952 = dma.done %s948, 256
        $region72: #{tpu_custom_call.1} parent=67 // pred_fallthru
          _
      $region68: #{tpu_custom_call.1} parent=5 // pred_fallthru
        _
    $region6: #{tpu_custom_call.1} parent=1 // loop_footer
      %s24 = sadd.s32 1, %s20
    $region7: #{tpu_custom_call.1} parent=1 // loop_footer_branch
      %19 = sbr.rel target = $region3
    $region8: #{tpu_custom_call.1} parent=1 // loop_exit
      _
    %953 = vsyncpa [#allocation3], 1
    %s954 = scalar_lea.sflag [#allocation3], 1
    %955 = vsyncpa %s954, 1
    %956 = vsyncpa [#allocation6], 1
    %957 = vsyncpa [#allocation4], 1
    %s958 = scalar_lea.sflag [#allocation4], 1
    %959 = vsyncpa %s958, 1

</llo_original>
